<compile_context>
chip_gen: v7x
topology: tpu7x:2x2x1
jax: 0.10.0
libtpu: 0.0.40
codegen_flags: <defaults>
</compile_context>

<pallas_src>
import numpy as np
import jax
import jax.numpy as jnp
from jax.experimental import pallas as pl
from jax.experimental.pallas import tpu as pltpu

LN_EPS = 1e-5   # torch.nn.LayerNorm default eps
LANES = 128


# --------------------------------------------------------------------------------------
# Fused NodeEncoder (+ identity MaxPool + concat) kernel
# --------------------------------------------------------------------------------------
def make_fused_kernel(num_copies):
    """Fused: Linear (weights pre-centered for LN) -> variance-normalize -> affine ->
    ReLU -> identity MaxPool3d(k=1) -> concat writeback.  All math in f32."""
    def kernel(x_ref, w_ref, bgb_ref, v_ref, o_ref):
        x = x_ref[...].astype(jnp.float32)                       # (T, p*F_in)
        w = w_ref[...].astype(jnp.float32)                       # (p*F_in, p*F_out)
        bgb = bgb_ref[...].astype(jnp.float32)                   # (3, p*F_out): b_c, gamma, beta
        # Weights/bias were mean-centered per LayerNorm segment on the host, so `h`
        # comes out of the MXU already centered (no mean pass in the kernel).
        h = jnp.dot(x, w, preferred_element_type=jnp.float32) + bgb[0:1, :]
        # Per-segment E[h^2], broadcast to every lane of its segment, via one extra MXU
        # matmul against the block-diagonal averaging matrix (replaces iota/where/XLU).
        var = jnp.dot(h * h, v_ref[...].astype(jnp.float32),
                      preferred_element_type=jnp.float32)
        hn = h * jax.lax.rsqrt(var + LN_EPS)
        hn = hn * bgb[1:2, :] + bgb[2:3, :]
        enc = jnp.maximum(hn, 0.0).astype(o_ref.dtype)            # ReLU
        o_ref[0] = enc                                            # "x" half of torch.cat((x, y), 1)
        if num_copies == 2:
            o_ref[1] = enc                                        # "y" half: MaxPool3d(k=1) == identity
    return kernel


def preprocess_params(params, rows):
    """One-time host-side constant prep (hoisted out of the per-forward path).

    * Folds the LayerNorm mean subtraction into the Linear weights/bias:
        W_c = W - mean_j(W),  b_c = b - mean(b)
      (per F_out segment, i.e. BEFORE the kron; the kron is block-diagonal so this is
      exactly equivalent to centering the unpacked output).
    * Packs p = 128 // F_out logical rows per 128-lane physical row (block-diagonal
      kron of the centered weights) so all kernel loads/stores are lane-dense.
    * Precomputes the block-diagonal averaging matrix V = kron(I_p, 11^T / F_out) used
      for the in-kernel per-segment variance matmul.
    """
    w, b, g, beta = params
    f_in, f_out = w.shape
    w = jnp.asarray(w, jnp.float32)
    b = jnp.asarray(b, jnp.float32).reshape(-1)
    g = jnp.asarray(g, jnp.float32).reshape(-1)
    beta = jnp.asarray(beta, jnp.float32).reshape(-1)

    w_c = w - jnp.mean(w, axis=1, keepdims=True)
    b_c = b - jnp.mean(b)

    p = 1
    if f_out < LANES and LANES % f_out == 0 and rows % (LANES // f_out) == 0:
        p = LANES // f_out
    # NOTE: if rows % (128 // f_out) != 0 we fall back to p=1 (masked 64-lane stores);
    # callers with awkward row counts should pad rows up front instead.

    if p > 1:
        eye = jnp.eye(p, dtype=jnp.float32)
        w2 = jnp.kron(eye, w_c)
        bgb = jnp.stack([jnp.tile(b_c, p), jnp.tile(g, p), jnp.tile(beta, p)])
        vmat = jnp.kron(eye, jnp.full((f_out, f_out), 1.0 / f_out, jnp.float32))
    else:
        w2 = w_c
        bgb = jnp.stack([b_c, g, beta])
        vmat = jnp.full((f_out, f_out), 1.0 / f_out, jnp.float32)
    return dict(p=p, f_in=f_in, f_out=f_out, w=w2, bgb=bgb, vmat=vmat)


def _pick_row_tile(rp, n_batch, pf_in, pf_out, num_copies, dtype,
                   target_rows=2048, vmem_budget_bytes=24 << 20):
    """Row tile: dtype-aware sublane multiple, capped by a VMEM byte budget (binding on
    v7x: 64 MiB physical / 32 MiB scoped), with a cdiv grid so no exact divisor is
    required, and >=2 total parallel grid steps so v7x's two TensorCores both get work."""
    itemsize = jnp.dtype(dtype).itemsize
    mult = {4: 8, 2: 16, 1: 32}.get(itemsize, 8)     # (8,128)/(16,128)/(32,128) tiling rule
    # Streamed bytes per packed row (double-buffered input + num_copies output copies).
    row_bytes = 2 * (pf_in + num_copies * pf_out) * itemsize
    const_bytes = 2 * 4 * (pf_in * pf_out + pf_out * pf_out + 8 * pf_out)
    vmem_rows = max(mult, (vmem_budget_bytes - const_bytes) // row_bytes)
    t = min(rp, target_rows, vmem_rows)
    if n_batch * pl.cdiv(rp, t) < 2 and rp >= 2 * mult:
        t = min(t, pl.cdiv(rp, 2))                   # guarantee >= 2 grid steps (megacore)
    if t < rp:
        t = max(mult, (t // mult) * mult)            # dtype-dependent sublane multiple
    else:
        t = rp                                       # full-axis block is always layout-legal
    return int(t)


def _fused_encode(x, prep, *, num_copies, target_rows=2048):
    n, c, d, h, f_in = x.shape
    p, f_out = prep["p"], prep["f_out"]
    assert f_in == prep["f_in"]
    rows = c * d * h
    assert rows % p == 0, "preprocess_params was built for a different row count"
    rp = rows // p
    pf_in, pf_out = p * f_in, p * f_out

    t = _pick_row_tile(rp, n, pf_in, pf_out, num_copies, x.dtype, target_rows=target_rows)
    grid = (n, pl.cdiv(rp, t))                       # partial last row tile is fine

    xp = x.reshape(n, rp, pf_in)                     # free, contiguous -> lane-dense slab

    out = pl.pallas_call(
        make_fused_kernel(num_copies),
        out_shape=jax.ShapeDtypeStruct((n, num_copies, rp, pf_out), x.dtype),
        grid=grid,
        in_specs=[
            pl.BlockSpec((None, t, pf_in), lambda i, r: (i, r, 0)),    # streamed activations
            pl.BlockSpec((pf_in, pf_out), lambda i, r: (0, 0)),        # resident centered weights
            pl.BlockSpec((3, pf_out), lambda i, r: (0, 0)),            # bias/gamma/beta merged
            pl.BlockSpec((pf_out, pf_out), lambda i, r: (0, 0)),       # variance-averaging matrix
        ],
        out_specs=pl.BlockSpec((None, num_copies, t, pf_out), lambda i, r: (i, 0, r, 0)),
        compiler_params=pltpu.CompilerParams(
            dimension_semantics=("parallel", "parallel"),
            # Consistent with the ~24 MiB streamed-block budget above (+ headroom);
            # fits v5e/v6e (128 MiB) and v7x (64 MiB physical / 32 MiB scoped).
            vmem_limit_bytes=32 * 1024 * 1024,
        ),
    )(xp, prep["w"], prep["bgb"], prep["vmat"])
    # (n, num_copies, rp, p*f_out) is byte-identical to (n, num_copies, c, d, h, f_out).
    return out


# --------------------------------------------------------------------------------------
# VectorNet forward
# --------------------------------------------------------------------------------------
def vectornet_forward(x, prep, *, kernel_size=1, target_rows=2048, concat_duplicate=True):
    n, c, d, h, _ = x.shape
    f_out = prep["f_out"]
    if kernel_size == 1:
        num_copies = 2 if concat_duplicate else 1
        out = _fused_encode(x, prep, num_copies=num_copies, target_rows=target_rows)
        if not concat_duplicate:
            # Consumer reads the same buffer for both concat halves (saves ~1/3 of HBM
            # write traffic); duplicate only at the graph level if truly required.
            return out.reshape(n, c, d, h, f_out)
        return out.reshape(n, 2 * c, d, h, f_out)    # == torch.cat((enc, pool(enc)), 1)
    # kernel_size != 1: the torch module's own concat is shape-invalid here for any real
    # input, so this path is effectively dead; the encoder still runs fused.
    # TODO(synk): dedicated Pallas MaxPool3d kernel omitted for this dead configuration.
    enc = _fused_encode(x, prep, num_copies=1, target_rows=target_rows)
    enc = enc.reshape(n, c, d, h, f_out)
    y = jax.lax.reduce_window(
        enc, -jnp.inf, jax.lax.max,
        (1, 1, kernel_size, kernel_size, kernel_size),
        (1, 1, kernel_size, kernel_size, kernel_size), "VALID")
    return jnp.concatenate([enc, y], axis=1)


# -------------------------------- reference (pure JAX) --------------------------------
def vectornet_ref(x, params, *, kernel_size):
    w, b, g, beta = params
    h = jnp.einsum("ncdhf,fo->ncdho", x.astype(jnp.float32), w,
                   precision=jax.lax.Precision.HIGHEST) + b.reshape(-1)
    mean = h.mean(-1, keepdims=True)
    var = jnp.square(h - mean).mean(-1, keepdims=True)
    hn = (h - mean) * jax.lax.rsqrt(var + LN_EPS) * g.reshape(-1) + beta.reshape(-1)
    enc = jnp.maximum(hn, 0.0)
    y = jax.lax.reduce_window(
        enc, -jnp.inf, jax.lax.max,
        (1, 1, kernel_size, kernel_size, kernel_size),
        (1, 1, kernel_size, kernel_size, kernel_size), "VALID")
    return jnp.concatenate([enc, y], axis=1)


if __name__ == "__main__":
    F_IN, F_OUT = 64, 64
    KERNEL_SIZE = 1            # see NOTE above re: module default of 1024
    N, C, D, H = 2, 2, 2, 4    # rows per batch element = C*D*H = 16

    key = jax.random.PRNGKey(0)
    k_w, k_b, k_x = jax.random.split(key, 3)
    bound = 1.0 / np.sqrt(F_IN)
    w = jax.random.uniform(k_w, (F_IN, F_OUT), jnp.float32, -bound, bound)
    b = jax.random.uniform(k_b, (1, F_OUT), jnp.float32, -bound, bound)
    g = jnp.ones((1, F_OUT), jnp.float32)       # LayerNorm weight init
    beta = jnp.zeros((1, F_OUT), jnp.float32)   # LayerNorm bias init
    params = (w, b, g, beta)

    x = jax.random.normal(k_x, (N, C, D, H, F_IN), jnp.float32)

    # One-time constant prep (hoisted out of the forward path).
    prep = preprocess_params(params, rows=C * D * H)

    # ---- f32 I/O run ----
    out = jax.block_until_ready(vectornet_forward(x, prep, kernel_size=KERNEL_SIZE))
    ref = vectornet_ref(x, params, kernel_size=KERNEL_SIZE)
    assert out.shape == (N, 2 * C, D, H, F_OUT), out.shape
    # Expected error is ~1e-6 (f32 multi-pass MXU); the looser bound only leaves headroom
    # for generation-dependent MXU pass-count differences vs. the XLA reference matmul.
    np.testing.assert_allclose(np.asarray(out), np.asarray(ref), rtol=2e-2, atol=2e-2)

    # ---- bf16-streamed run (halves HBM read+write bytes; internal math stays f32) ----
    x_bf16 = x.astype(jnp.bfloat16)
    out_bf = jax.block_until_ready(vectornet_forward(x_bf16, prep, kernel_size=KERNEL_SIZE))
    ref_bf = vectornet_ref(x_bf16.astype(jnp.float32), params, kernel_size=KERNEL_SIZE)
    assert out_bf.dtype == jnp.bfloat16 and out_bf.shape == (N, 2 * C, D, H, F_OUT)
    np.testing.assert_allclose(np.asarray(out_bf, dtype=np.float32), np.asarray(ref_bf),
                               rtol=5e-2, atol=5e-2)

    print("KERNEL_OK")
</pallas_src>

<mosaic_0001>
module attributes {stable_mosaic.version = 11 : i64} {
  func.func @kernel(%arg0: i32, %arg1: i32, %arg2: memref<1x8x128xf32, #tpu.memory_space<vmem>>, %arg3: memref<128x128xf32, #tpu.memory_space<vmem>>, %arg4: memref<3x128xf32, #tpu.memory_space<vmem>>, %arg5: memref<128x128xf32, #tpu.memory_space<vmem>>, %arg6: memref<1x2x8x128xf32, #tpu.memory_space<vmem>>) attributes {dimension_semantics = [#tpu.dimension_semantics<parallel>, #tpu.dimension_semantics<parallel>], iteration_bounds = array<i64: 2, 1>, scalar_prefetch = 0 : i64, scratch_operands = 0 : i64, tpu.core_type = #tpu.core_type<tc>, window_params = [{transform_indices = @transform_0, window_bounds = array<i64: 1, 8, 128>}, {pipeline_mode = #tpu.pipeline_mode<synchronous>, transform_indices = @transform_1, window_bounds = array<i64: 128, 128>}, {pipeline_mode = #tpu.pipeline_mode<synchronous>, transform_indices = @transform_2, window_bounds = array<i64: 3, 128>}, {pipeline_mode = #tpu.pipeline_mode<synchronous>, transform_indices = @transform_3, window_bounds = array<i64: 128, 128>}, {transform_indices = @transform_4, window_bounds = array<i64: 1, 2, 8, 128>}]} {
    %c0 = arith.constant 0 : index
    %c0_0 = arith.constant 0 : index
    %c0_1 = arith.constant 0 : index
    %0 = vector.load %arg2[%c0, %c0_0, %c0_1] : memref<1x8x128xf32, #tpu.memory_space<vmem>>, vector<1x8x128xf32>
    %1 = vector.shape_cast %0 : vector<1x8x128xf32> to vector<8x128xf32>
    %c0_2 = arith.constant 0 : index
    %c0_3 = arith.constant 0 : index
    %2 = vector.load %arg3[%c0_2, %c0_3] : memref<128x128xf32, #tpu.memory_space<vmem>>, vector<128x128xf32>
    %c0_4 = arith.constant 0 : index
    %c0_5 = arith.constant 0 : index
    %3 = vector.load %arg4[%c0_4, %c0_5] : memref<3x128xf32, #tpu.memory_space<vmem>>, vector<3x128xf32>
    %cst = arith.constant dense<0.000000e+00> : vector<8x128xf32>
    %4 = tpu.matmul %1, %2, %cst {dimension_numbers = #tpu.dot_dimension_numbers<[1], [0], [0], [1], [0, 0, 1, 1], [], []>} : vector<8x128xf32>, vector<128x128xf32>, vector<8x128xf32> -> vector<8x128xf32>
    %5 = vector.extract_strided_slice %3 {offsets = [0, 0], sizes = [1, 128], strides = [1, 1]} : vector<3x128xf32> to vector<1x128xf32>
    %6 = vector.broadcast %5 : vector<1x128xf32> to vector<8x128xf32>
    %7 = arith.addf %4, %6 : vector<8x128xf32>
    %8 = arith.mulf %7, %7 : vector<8x128xf32>
    %c0_6 = arith.constant 0 : index
    %c0_7 = arith.constant 0 : index
    %9 = vector.load %arg5[%c0_6, %c0_7] : memref<128x128xf32, #tpu.memory_space<vmem>>, vector<128x128xf32>
    %cst_8 = arith.constant dense<0.000000e+00> : vector<8x128xf32>
    %10 = tpu.matmul %8, %9, %cst_8 {dimension_numbers = #tpu.dot_dimension_numbers<[1], [0], [0], [1], [0, 0, 1, 1], [], []>} : vector<8x128xf32>, vector<128x128xf32>, vector<8x128xf32> -> vector<8x128xf32>
    %cst_9 = arith.constant 9.99999974E-6 : f32
    %11 = vector.broadcast %cst_9 : f32 to vector<8x128xf32>
    %12 = arith.addf %10, %11 : vector<8x128xf32>
    %13 = math.rsqrt %12 : vector<8x128xf32>
    %14 = arith.mulf %7, %13 : vector<8x128xf32>
    %15 = vector.extract_strided_slice %3 {offsets = [1, 0], sizes = [1, 128], strides = [1, 1]} : vector<3x128xf32> to vector<1x128xf32>
    %16 = vector.broadcast %15 : vector<1x128xf32> to vector<8x128xf32>
    %17 = arith.mulf %14, %16 : vector<8x128xf32>
    %18 = vector.extract_strided_slice %3 {offsets = [2, 0], sizes = [1, 128], strides = [1, 1]} : vector<3x128xf32> to vector<1x128xf32>
    %19 = vector.broadcast %18 : vector<1x128xf32> to vector<8x128xf32>
    %20 = arith.addf %17, %19 : vector<8x128xf32>
    %cst_10 = arith.constant 0.000000e+00 : f32
    %21 = vector.broadcast %cst_10 : f32 to vector<8x128xf32>
    %22 = arith.maximumf %20, %21 : vector<8x128xf32>
    %c0_11 = arith.constant 0 : index
    %c0_12 = arith.constant 0 : index
    %c0_13 = arith.constant 0 : index
    %c0_14 = arith.constant 0 : index
    %23 = vector.load %arg6[%c0_11, %c0_12, %c0_13, %c0_14] : memref<1x2x8x128xf32, #tpu.memory_space<vmem>>, vector<1x1x8x128xf32>
    %24 = vector.shape_cast %23 : vector<1x1x8x128xf32> to vector<8x128xf32>
    %25 = vector.shape_cast %22 : vector<8x128xf32> to vector<1x1x8x128xf32>
    tpu.vector_store %arg6[%c0_11, %c0_12, %c0_13, %c0_14], %25 {strides = array<i32>} : memref<1x2x8x128xf32, #tpu.memory_space<vmem>>, vector<1x1x8x128xf32>,
    %c0_15 = arith.constant 0 : index
    %c1 = arith.constant 1 : index
    %c0_16 = arith.constant 0 : index
    %c0_17 = arith.constant 0 : index
    %26 = vector.load %arg6[%c0_15, %c1, %c0_16, %c0_17] : memref<1x2x8x128xf32, #tpu.memory_space<vmem>>, vector<1x1x8x128xf32>
    %27 = vector.shape_cast %26 : vector<1x1x8x128xf32> to vector<8x128xf32>
    %28 = vector.shape_cast %22 : vector<8x128xf32> to vector<1x1x8x128xf32>
    tpu.vector_store %arg6[%c0_15, %c1, %c0_16, %c0_17], %28 {strides = array<i32>} : memref<1x2x8x128xf32, #tpu.memory_space<vmem>>, vector<1x1x8x128xf32>,
    return
  }
  func.func @transform_0(%arg0: i32, %arg1: i32) -> (i32, i32, i32) {
    %c0_i32 = arith.constant 0 : i32
    %c0_i32_0 = arith.constant 0 : i32
    return %arg0, %arg1, %c0_i32 : i32, i32, i32
  }
  func.func @transform_1(%arg0: i32, %arg1: i32) -> (i32, i32) {
    %c0_i32 = arith.constant 0 : i32
    %c0_i32_0 = arith.constant 0 : i32
    %c0_i32_1 = arith.constant 0 : i32
    return %c0_i32, %c0_i32_0 : i32, i32
  }
  func.func @transform_2(%arg0: i32, %arg1: i32) -> (i32, i32) {
    %c0_i32 = arith.constant 0 : i32
    %c0_i32_0 = arith.constant 0 : i32
    %c0_i32_1 = arith.constant 0 : i32
    return %c0_i32, %c0_i32_0 : i32, i32
  }
  func.func @transform_3(%arg0: i32, %arg1: i32) -> (i32, i32) {
    %c0_i32 = arith.constant 0 : i32
    %c0_i32_0 = arith.constant 0 : i32
    %c0_i32_1 = arith.constant 0 : i32
    return %c0_i32, %c0_i32_0 : i32, i32
  }
  func.func @transform_4(%arg0: i32, %arg1: i32) -> (i32, i32, i32, i32) {
    %c0_i32 = arith.constant 0 : i32
    %c0_i32_0 = arith.constant 0 : i32
    %c0_i32_1 = arith.constant 0 : i32
    return %arg0, %c0_i32, %arg1, %c0_i32_0 : i32, i32, i32, i32
  }
}

</mosaic_0001>

<llo_original>
// kernel: tpu_custom_call.1
$region0: #{tpu_custom_call.1}
  #allocation0 [shape = 'u32[]', space=smem, size = 0x4, offset = 0x4, fixed_abs, tag = 'smem constant byte address 0x4 - core index']
  #allocation1 [shape = 'u32[144,128]{1,0:T(1,128)}', space=vmem, size = 0x12000, scoped, tag = 'internal scratch']
  %s0 = inlined_call_operand.hbm [shape: f32[2,8,128], index: 0, kind: input, shape index: {}]
  %s1 = inlined_call_operand.hbm [shape: f32[128,128], index: 1, kind: input, shape index: {}]
  %s2 = inlined_call_operand.vmem [shape: f32[3,128], index: 2, kind: input, shape index: {}]
  %s3 = inlined_call_operand.hbm [shape: f32[128,128], index: 3, kind: input, shape index: {}]
  %s4 = inlined_call_operand.hbm [shape: f32[2,2,8,128], index: 4, kind: output, shape index: {}]
  %s5 = sld [smem:[#allocation0]]
  $region61: #{tpu_custom_call.1} parent=0
    _
  %s7 = ssub.s32 1, %s5
  %s8 = scalar_select 0, %s7, %s5
  $region1: #{tpu_custom_call.1} parent=0
    #allocation2 [shape = 'u8[8192]{0}', space=vmem, size = 0x2000, scoped, tag = 'input window, operand 0']
    #allocation3 [shape = 's32[2]{0}', space=sflag, size = 0x8, scoped, tag = 'scoped memory for tpu_custom_call.1']
    #allocation4 [shape = 's32[2]{0}', space=sflag, size = 0x8, scoped, tag = 'scoped memory for tpu_custom_call.1']
    #allocation5 [shape = 'u8[65536]{0}', space=vmem, size = 0x10000, scoped, tag = 'input window, operand 1, single buffered']
    #allocation6 [shape = 's32[1]{0}', space=sflag, size = 0x4, scoped, tag = 'scoped memory for tpu_custom_call.1']
    #allocation7 [shape = 'u8[65536]{0}', space=vmem, size = 0x10000, scoped, tag = 'input window, operand 3, single buffered']
    #allocation8 [shape = 'u8[16384]{0}', space=vmem, size = 0x4000, scoped, tag = 'output window, operand 0']
    %9 = vsyncpa [#allocation3], 0
    %s10 = scalar_lea.sflag [#allocation3], 1
    %11 = vsyncpa %s10, 0
    %12 = vsyncpa [#allocation6], 0
    %13 = vsyncpa [#allocation4], 0
    %s14 = scalar_lea.sflag [#allocation4], 1
    %15 = vsyncpa %s14, 0
    loop: start=0, step=1, limit=4
    $region2: #{tpu_custom_call.1} parent=1 // loop_pre_header
      _
    $region3: #{tpu_custom_call.1} parent=1 // loop_header
      %s17 = sphi 0, %s21
      %p18 = scmp.ge.s32.totalorder %s17, 4
      %s24 = sphi 0, %s36
      %s25 = sphi 0, %s32
      %s26 = sphi 0, %s24
      %s27 = sphi 0, %s25
      %s28 = sphi 0, %s26
      %s29 = sphi 0, %s27
      %s41 = sphi 0, %s43
      %s44 = sphi 0, %s41
      %s45 = sphi 0, %s44
      %s61 = sphi 0, %s45
      %s65 = sphi 0, %s65
      %s67 = sphi 0, %s65
      %s68 = sphi 0, %s67
      %s82 = sphi 0, %s68
      %s86 = sphi 0, %s86
      %s88 = sphi 0, %s86
      %s89 = sphi 0, %s88
      %s103 = sphi 0, %s89
      %s107 = sphi 0, %s107
      %s109 = sphi 0, %s107
      %s110 = sphi 0, %s109
      %s124 = sphi 0, %s110
      %s132 = sphi 0, %s134
      %s135 = sphi 0, %s132
      %s136 = sphi 0, %s135
      %s152 = sphi 0, %s136
    $region4: #{tpu_custom_call.1} parent=1 // loop_header_branch
      %20 = sbr.rel (%p18) target = $region8
    $region5: #{tpu_custom_call.1} parent=1 // loop_body
      %s22 = ssub.s32 %s17, 1
      %s23 = ssub.s32 %s17, 2
      %s30 = sadd.s32 1, %s25
      %p31 = scmp.ge.s32.totalorder %s30, 1
      %s32 = scalar_select %p31, 0, %s30
      %s33 = sadd.s32 1, %s24
      %s34 = scalar_select %p31, %s33, %s24
      %p35 = scmp.ge.s32.totalorder %s34, 2
      %s36 = scalar_select %p35, 0, %s34
      %s37 = ssub.s32 %s24, %s36
      %s38 = ssub.s32 %s25, %s32
      %s39 = sor.u32 %s37, %s38
      %p40 = scmp.eq.s32.totalorder %s39, 0
      %s42 = sadd.s32 %s41, 1
      %s43 = scalar_select %p40, %s41, %s42
      %p46 = pneg %p40
      %p47 = scmp.eq.s32.totalorder %s17, 1
      %p48 = por %p46, %p47
      %p49 = scmp.ne.s32.totalorder %s41, %s44
      %p50 = scmp.eq.s32.totalorder %s17, 0
      %p51 = por %p49, %p50
      %p52 = scmp.ne.s32.totalorder %s41, %s44
      %p53 = scmp.eq.s32.totalorder %s22, 1
      %p54 = por %p52, %p53
      %p55 = scmp.ne.s32.totalorder %s44, %s45
      %p56 = scmp.eq.s32.totalorder %s22, 0
      %p57 = por %p55, %p56
      %p58 = scmp.ne.s32.totalorder %s44, %s45
      %p59 = scmp.eq.s32.totalorder %s23, 1
      %p60 = por %p58, %p59
      %p62 = scmp.ne.s32.totalorder %s45, %s61
      %p63 = scmp.eq.s32.totalorder %s23, 0
      %p64 = por %p62, %p63
      %s66 = sadd.s32 %s65, 1
      %p69 = scmp.eq.s32.totalorder %s17, 1
      %p70 = scmp.ne.s32.totalorder %s65, %s67
      %p71 = scmp.eq.s32.totalorder %s17, 0
      %p72 = por %p70, %p71
      %p73 = scmp.ne.s32.totalorder %s65, %s67
      %p74 = scmp.eq.s32.totalorder %s22, 1
      %p75 = por %p73, %p74
      %p76 = scmp.ne.s32.totalorder %s67, %s68
      %p77 = scmp.eq.s32.totalorder %s22, 0
      %p78 = por %p76, %p77
      %p79 = scmp.ne.s32.totalorder %s67, %s68
      %p80 = scmp.eq.s32.totalorder %s23, 1
      %p81 = por %p79, %p80
      %p83 = scmp.ne.s32.totalorder %s68, %s82
      %p84 = scmp.eq.s32.totalorder %s23, 0
      %p85 = por %p83, %p84
      %s87 = sadd.s32 %s86, 1
      %p90 = scmp.eq.s32.totalorder %s17, 1
      %p91 = scmp.ne.s32.totalorder %s86, %s88
      %p92 = scmp.eq.s32.totalorder %s17, 0
      %p93 = por %p91, %p92
      %p94 = scmp.ne.s32.totalorder %s86, %s88
      %p95 = scmp.eq.s32.totalorder %s22, 1
      %p96 = por %p94, %p95
      %p97 = scmp.ne.s32.totalorder %s88, %s89
      %p98 = scmp.eq.s32.totalorder %s22, 0
      %p99 = por %p97, %p98
      %p100 = scmp.ne.s32.totalorder %s88, %s89
      %p101 = scmp.eq.s32.totalorder %s23, 1
      %p102 = por %p100, %p101
      %p104 = scmp.ne.s32.totalorder %s89, %s103
      %p105 = scmp.eq.s32.totalorder %s23, 0
      %p106 = por %p104, %p105
      %s108 = sadd.s32 %s107, 1
      %p111 = scmp.eq.s32.totalorder %s17, 1
      %p112 = scmp.ne.s32.totalorder %s107, %s109
      %p113 = scmp.eq.s32.totalorder %s17, 0
      %p114 = por %p112, %p113
      %p115 = scmp.ne.s32.totalorder %s107, %s109
      %p116 = scmp.eq.s32.totalorder %s22, 1
      %p117 = por %p115, %p116
      %p118 = scmp.ne.s32.totalorder %s109, %s110
      %p119 = scmp.eq.s32.totalorder %s22, 0
      %p120 = por %p118, %p119
      %p121 = scmp.ne.s32.totalorder %s109, %s110
      %p122 = scmp.eq.s32.totalorder %s23, 1
      %p123 = por %p121, %p122
      %p125 = scmp.ne.s32.totalorder %s110, %s124
      %p126 = scmp.eq.s32.totalorder %s23, 0
      %p127 = por %p125, %p126
      %s128 = ssub.s32 %s24, %s36
      %s129 = ssub.s32 %s25, %s32
      %s130 = sor.u32 %s128, %s129
      %p131 = scmp.eq.s32.totalorder %s130, 0
      %s133 = sadd.s32 %s132, 1
      %s134 = scalar_select %p131, %s132, %s133
      %p137 = pneg %p131
      %p138 = scmp.eq.s32.totalorder %s17, 1
      %p139 = por %p137, %p138
      %p140 = scmp.ne.s32.totalorder %s132, %s135
      %p141 = scmp.eq.s32.totalorder %s17, 0
      %p142 = por %p140, %p141
      %p143 = scmp.ne.s32.totalorder %s132, %s135
      %p144 = scmp.eq.s32.totalorder %s22, 1
      %p145 = por %p143, %p144
      %p146 = scmp.ne.s32.totalorder %s135, %s136
      %p147 = scmp.eq.s32.totalorder %s22, 0
      %p148 = por %p146, %p147
      %p149 = scmp.ne.s32.totalorder %s135, %s136
      %p150 = scmp.eq.s32.totalorder %s23, 1
      %p151 = por %p149, %p150
      %p153 = scmp.ne.s32.totalorder %s136, %s152
      %p154 = scmp.eq.s32.totalorder %s23, 0
      %p155 = por %p153, %p154
      %p156 = scmp.le.s32.totalorder 1, %s17
      %p157 = scmp.lt.s32.totalorder %s17, 3
      %p158 = pnand %p156, %p157
      %p159 = pneg %p158
      // Predicated region
      $region9: #{tpu_custom_call.1} parent=5 // pred_check
        _
      $region10: #{tpu_custom_call.1} parent=5 // pred_check_branch
        %161 = sbr.rel (%p158) target = $region12
      $region11: #{tpu_custom_call.1} parent=5 // pred_region
        %s162 = ssub.s32 %s17, 1
        // Predicated region
        $region13: #{tpu_custom_call.1} parent=11 // pred_check
          %p163 = pneg %p78
        $region14: #{tpu_custom_call.1} parent=11 // pred_check_branch
          %165 = sbr.rel (%p163) target = $region16
        $region15: #{tpu_custom_call.1} parent=11 // pred_region
          %s167 = ssub.s32 2048, 2048
          %168 = vsyncadd [#allocation6], %s167
          %s169 = sshll.u32 [#allocation5], 4
          %s170 = int_to_ptr.vmem [resolvable:$true] %s169
          %175 = dma.hbm_to_vmem [thread:$0]  %s1, 2048, %s170, [#allocation6], 128, 128, 8
        $region16: #{tpu_custom_call.1} parent=11 // pred_fallthru
          _
        // Predicated region
        $region17: #{tpu_custom_call.1} parent=11 // pred_check
          %p176 = pneg %p99
        $region18: #{tpu_custom_call.1} parent=11 // pred_check_branch
          %178 = sbr.rel (%p176) target = $region20
        $region19: #{tpu_custom_call.1} parent=11 // pred_region
          _
        $region20: #{tpu_custom_call.1} parent=11 // pred_fallthru
          _
        // Predicated region
        $region21: #{tpu_custom_call.1} parent=11 // pred_check
          %p179 = pneg %p120
        $region22: #{tpu_custom_call.1} parent=11 // pred_check_branch
          %181 = sbr.rel (%p179) target = $region24
        $region23: #{tpu_custom_call.1} parent=11 // pred_region
          %s183 = ssub.s32 2048, 2048
          %184 = vsyncadd [#allocation6], %s183
          %s185 = sshll.u32 [#allocation7], 4
          %s186 = int_to_ptr.vmem [resolvable:$true] %s185
          %191 = dma.hbm_to_vmem [thread:$0]  %s3, 2048, %s186, [#allocation6], 128, 128, 8
        $region24: #{tpu_custom_call.1} parent=11 // pred_fallthru
          _
      $region12: #{tpu_custom_call.1} parent=5 // pred_fallthru
        _
      %p192 = scmp.lt.s32.totalorder %s17, 2
      // Predicated region
      $region25: #{tpu_custom_call.1} parent=5 // pred_check
        %p193 = pneg %p192
      $region26: #{tpu_custom_call.1} parent=5 // pred_check_branch
        %195 = sbr.rel (%p193) target = $region28
      $region27: #{tpu_custom_call.1} parent=5 // pred_region
        // Predicated region
        $region29: #{tpu_custom_call.1} parent=27 // pred_check
          %p196 = pneg %p51
        $region30: #{tpu_custom_call.1} parent=27 // pred_check_branch
          %198 = sbr.rel (%p196) target = $region32
        $region31: #{tpu_custom_call.1} parent=27 // pred_region
          %s199 = sand.u32 %s41, 1
          %s200 = scalar_lea.sflag [#allocation3], %s199
          %s201 = sand.u32 %s41, 1
          %s202 = smul.addr %s201, 8
          %s203 = scalar_lea.vmem [#allocation2], %s202
          %s205 = ssub.s32 128, 128
          %206 = vsyncadd %s200, %s205
          %s207 = sadd.s32 %s25, %s24
          %s208 = smul.addr %s207, 128
          %s209 = scalar_lea.hbm %s0, %s208
          %s211 = sshll.u32 %s203, 4
          %s212 = int_to_ptr.vmem [resolvable:$true] %s211
          %214 = dma.hbm_to_vmem [thread:$0]  %s209, 128, %s212, %s200
        $region32: #{tpu_custom_call.1} parent=27 // pred_fallthru
          _
      $region28: #{tpu_custom_call.1} parent=5 // pred_fallthru
        _
      %p215 = scmp.le.s32.totalorder 1, %s17
      %p216 = scmp.lt.s32.totalorder %s17, 3
      %p217 = pnand %p215, %p216
      %p218 = pneg %p217
      // Predicated region
      $region33: #{tpu_custom_call.1} parent=5 // pred_check
        _
      $region34: #{tpu_custom_call.1} parent=5 // pred_check_branch
        %220 = sbr.rel (%p217) target = $region36
      $region35: #{tpu_custom_call.1} parent=5 // pred_region
        %s221 = ssub.s32 %s17, 1
        %s222 = sand.u32 %s44, 1
        %s223 = scalar_lea.sflag [#allocation3], %s222
        %s224 = sand.u32 %s44, 1
        %s225 = smul.addr %s224, 8
        %s226 = scalar_lea.vmem [#allocation2], %s225
        // Predicated region
        $region37: #{tpu_custom_call.1} parent=35 // pred_check
          %p227 = pneg %p57
        $region38: #{tpu_custom_call.1} parent=35 // pred_check_branch
          %229 = sbr.rel (%p227) target = $region40
        $region39: #{tpu_custom_call.1} parent=35 // pred_region
          %230 = dma.done %s223, 128
        $region40: #{tpu_custom_call.1} parent=35 // pred_fallthru
          _
        // Predicated region
        $region41: #{tpu_custom_call.1} parent=35 // pred_check
          %p231 = pneg %p78
        $region42: #{tpu_custom_call.1} parent=35 // pred_check_branch
          %233 = sbr.rel (%p231) target = $region44
        $region43: #{tpu_custom_call.1} parent=35 // pred_region
          %234 = dma.done [#allocation6], 2048
        $region44: #{tpu_custom_call.1} parent=35 // pred_fallthru
          _
        // Predicated region
        $region45: #{tpu_custom_call.1} parent=35 // pred_check
          %p235 = pneg %p120
        $region46: #{tpu_custom_call.1} parent=35 // pred_check_branch
          %237 = sbr.rel (%p235) target = $region48
        $region47: #{tpu_custom_call.1} parent=35 // pred_region
          %238 = dma.done [#allocation6], 2048
        $region48: #{tpu_custom_call.1} parent=35 // pred_fallthru
          _
        %s239 = sand.u32 %s44, 1
        %s240 = scalar_lea.sflag [#allocation3], %s239
        %s241 = sand.u32 %s44, 1
        %s242 = smul.addr %s241, 8
        %s243 = scalar_lea.vmem [#allocation2], %s242
        %p244 = pneg %p57
        %p245 = pneg %p54
        %p246 = pneg %p78
        %p247 = pneg %p75
        %p248 = pneg %p99
        %p249 = pneg %p96
        %p250 = pneg %p120
        %p251 = pneg %p117
        %p252 = pneg %p148
        %p253 = pneg %p145
        %s254 = sand.u32 %s135, 1
        %s255 = scalar_lea.sflag [#allocation4], %s254
        %s256 = sand.u32 %s135, 1
        %s257 = smul.addr %s256, 16
        %s258 = scalar_lea.vmem [#allocation8], %s257
        %v259 = vld [vmem:[%s226] sm:$0xff]
        %v260 = vld [vmem:[#allocation5] sm:$0xff]
        %v261 = vld [vmem:[#allocation5 + $0x8] sm:$0xff]
        %v262 = vld [vmem:[#allocation5 + $0x10] sm:$0xff]
        %v263 = vld [vmem:[#allocation5 + $0x18] sm:$0xff]
        %v264 = vld [vmem:[#allocation5 + $0x20] sm:$0xff]
        %v265 = vld [vmem:[#allocation5 + $0x28] sm:$0xff]
        %v266 = vld [vmem:[#allocation5 + $0x30] sm:$0xff]
        %v267 = vld [vmem:[#allocation5 + $0x38] sm:$0xff]
        %v268 = vld [vmem:[#allocation5 + $0x40] sm:$0xff]
        %v269 = vld [vmem:[#allocation5 + $0x48] sm:$0xff]
        %v270 = vld [vmem:[#allocation5 + $0x50] sm:$0xff]
        %v271 = vld [vmem:[#allocation5 + $0x58] sm:$0xff]
        %v272 = vld [vmem:[#allocation5 + $0x60] sm:$0xff]
        %v273 = vld [vmem:[#allocation5 + $0x68] sm:$0xff]
        %v274 = vld [vmem:[#allocation5 + $0x70] sm:$0xff]
        %v275 = vld [vmem:[#allocation5 + $0x78] sm:$0xff]
        %v276 = vld [vmem:[%s2] sm:$0x7]
        %v277 = vlaneseq
        %v278 = vshrl.u32 %v277, 7
        %v279 = vsub.s32 0, %v278
        %v280 = vrot.slane %v276, %v279
        %281 = vmatprep.subr.mxu0 0.0
        %282 = vmatpush1.msra.mxu0 %v260
        %283 = vmatprep.subr.mxu0 0.0
        %284 = vmatpush1.msra.mxu0 %v261
        %285 = vmatprep.subr.mxu0 0.0
        %286 = vmatpush1.msra.mxu0 %v262
        %287 = vmatprep.subr.mxu0 0.0
        %288 = vmatpush1.msra.mxu0 %v263
        %289 = vmatprep.subr.mxu0 0.0
        %290 = vmatpush1.msra.mxu0 %v264
        %291 = vmatprep.subr.mxu0 0.0
        %292 = vmatpush1.msra.mxu0 %v265
        %293 = vmatprep.subr.mxu0 0.0
        %294 = vmatpush1.msra.mxu0 %v266
        %295 = vmatprep.subr.mxu0 0.0
        %296 = vmatpush1.msra.mxu0 %v267
        %297 = vmatprep.subr.mxu0 0.0
        %298 = vmatpush1.msra.mxu0 %v268
        %299 = vmatprep.subr.mxu0 0.0
        %300 = vmatpush1.msra.mxu0 %v269
        %301 = vmatprep.subr.mxu0 0.0
        %302 = vmatpush1.msra.mxu0 %v270
        %303 = vmatprep.subr.mxu0 0.0
        %304 = vmatpush1.msra.mxu0 %v271
        %305 = vmatprep.subr.mxu0 0.0
        %306 = vmatpush1.msra.mxu0 %v272
        %307 = vmatprep.subr.mxu0 0.0
        %308 = vmatpush1.msra.mxu0 %v273
        %309 = vmatprep.subr.mxu0 0.0
        %310 = vmatpush1.msra.mxu0 %v274
        %311 = vmatprep.subr.mxu0 0.0
        %312 = vmatpush1.msra.mxu0 %v275
        %313 = vmatprep.subr.mxu0 0.0
        %314 = vmatpush1.msra.mxu0 0.0
        %315 = vmatprep.subr.mxu0 0.0
        %316 = vmatpush1.msra.mxu0 0.0
        %317 = vmatprep.subr.mxu0 0.0
        %318 = vmatpush1.msra.mxu0 0.0
        %319 = vmatprep.subr.mxu0 0.0
        %320 = vmatpush1.msra.mxu0 0.0
        %321 = vmatprep.subr.mxu0 0.0
        %322 = vmatpush1.msra.mxu0 0.0
        %323 = vmatprep.subr.mxu0 0.0
        %324 = vmatpush1.msra.mxu0 0.0
        %325 = vmatprep.subr.mxu0 0.0
        %326 = vmatpush1.msra.mxu0 0.0
        %327 = vmatprep.subr.mxu0 0.0
        %328 = vmatpush1.msra.mxu0 0.0
        %329 = vmatprep.subr.mxu0 0.0
        %330 = vmatpush1.msra.mxu0 0.0
        %331 = vmatprep.subr.mxu0 0.0
        %332 = vmatpush1.msra.mxu0 0.0
        %333 = vmatprep.subr.mxu0 0.0
        %334 = vmatpush1.msra.mxu0 0.0
        %335 = vmatprep.subr.mxu0 0.0
        %336 = vmatpush1.msra.mxu0 0.0
        %337 = vmatprep.subr.mxu0 0.0
        %338 = vmatpush1.msra.mxu0 0.0
        %339 = vmatprep.subr.mxu0 0.0
        %340 = vmatpush1.msra.mxu0 0.0
        %341 = vmatprep.subr.mxu0 0.0
        %342 = vmatpush1.msra.mxu0 0.0
        %343 = vmatprep.subr.mxu0 0.0
        %344 = vmatpush1.msra.mxu0 0.0
        %345 = vmatprep.mubr.f32.mxu0 0.0
        %346 = vmatmul.mubr.f32.gmra.mrb[0].mxu0 %v259
        %v347 = vpop.f32.mrb[0].mxu0
        %v348 = vadd.f32 %v280, %v347
        %v349 = vpop.f32.mrb[0].mxu0
        %350 = vdwg.mxu0
        %v351 = vmul.f32 %v348, %v348
        %v352 = vld [vmem:[#allocation7] sm:$0xff]
        %v353 = vld [vmem:[#allocation7 + $0x8] sm:$0xff]
        %v354 = vld [vmem:[#allocation7 + $0x10] sm:$0xff]
        %v355 = vld [vmem:[#allocation7 + $0x18] sm:$0xff]
        %v356 = vld [vmem:[#allocation7 + $0x20] sm:$0xff]
        %v357 = vld [vmem:[#allocation7 + $0x28] sm:$0xff]
        %v358 = vld [vmem:[#allocation7 + $0x30] sm:$0xff]
        %v359 = vld [vmem:[#allocation7 + $0x38] sm:$0xff]
        %v360 = vld [vmem:[#allocation7 + $0x40] sm:$0xff]
        %v361 = vld [vmem:[#allocation7 + $0x48] sm:$0xff]
        %v362 = vld [vmem:[#allocation7 + $0x50] sm:$0xff]
        %v363 = vld [vmem:[#allocation7 + $0x58] sm:$0xff]
        %v364 = vld [vmem:[#allocation7 + $0x60] sm:$0xff]
        %v365 = vld [vmem:[#allocation7 + $0x68] sm:$0xff]
        %v366 = vld [vmem:[#allocation7 + $0x70] sm:$0xff]
        %v367 = vld [vmem:[#allocation7 + $0x78] sm:$0xff]
        %368 = vmatprep.subr.mxu0 0.0
        %369 = vmatpush1.msra.mxu0 %v352
        %370 = vmatprep.subr.mxu0 0.0
        %371 = vmatpush1.msra.mxu0 %v353
        %372 = vmatprep.subr.mxu0 0.0
        %373 = vmatpush1.msra.mxu0 %v354
        %374 = vmatprep.subr.mxu0 0.0
        %375 = vmatpush1.msra.mxu0 %v355
        %376 = vmatprep.subr.mxu0 0.0
        %377 = vmatpush1.msra.mxu0 %v356
        %378 = vmatprep.subr.mxu0 0.0
        %379 = vmatpush1.msra.mxu0 %v357
        %380 = vmatprep.subr.mxu0 0.0
        %381 = vmatpush1.msra.mxu0 %v358
        %382 = vmatprep.subr.mxu0 0.0
        %383 = vmatpush1.msra.mxu0 %v359
        %384 = vmatprep.subr.mxu0 0.0
        %385 = vmatpush1.msra.mxu0 %v360
        %386 = vmatprep.subr.mxu0 0.0
        %387 = vmatpush1.msra.mxu0 %v361
        %388 = vmatprep.subr.mxu0 0.0
        %389 = vmatpush1.msra.mxu0 %v362
        %390 = vmatprep.subr.mxu0 0.0
        %391 = vmatpush1.msra.mxu0 %v363
        %392 = vmatprep.subr.mxu0 0.0
        %393 = vmatpush1.msra.mxu0 %v364
        %394 = vmatprep.subr.mxu0 0.0
        %395 = vmatpush1.msra.mxu0 %v365
        %396 = vmatprep.subr.mxu0 0.0
        %397 = vmatpush1.msra.mxu0 %v366
        %398 = vmatprep.subr.mxu0 0.0
        %399 = vmatpush1.msra.mxu0 %v367
        %400 = vmatprep.subr.mxu0 0.0
        %401 = vmatpush1.msra.mxu0 0.0
        %402 = vmatprep.subr.mxu0 0.0
        %403 = vmatpush1.msra.mxu0 0.0
        %404 = vmatprep.subr.mxu0 0.0
        %405 = vmatpush1.msra.mxu0 0.0
        %406 = vmatprep.subr.mxu0 0.0
        %407 = vmatpush1.msra.mxu0 0.0
        %408 = vmatprep.subr.mxu0 0.0
        %409 = vmatpush1.msra.mxu0 0.0
        %410 = vmatprep.subr.mxu0 0.0
        %411 = vmatpush1.msra.mxu0 0.0
        %412 = vmatprep.subr.mxu0 0.0
        %413 = vmatpush1.msra.mxu0 0.0
        %414 = vmatprep.subr.mxu0 0.0
        %415 = vmatpush1.msra.mxu0 0.0
        %416 = vmatprep.subr.mxu0 0.0
        %417 = vmatpush1.msra.mxu0 0.0
        %418 = vmatprep.subr.mxu0 0.0
        %419 = vmatpush1.msra.mxu0 0.0
        %420 = vmatprep.subr.mxu0 0.0
        %421 = vmatpush1.msra.mxu0 0.0
        %422 = vmatprep.subr.mxu0 0.0
        %423 = vmatpush1.msra.mxu0 0.0
        %424 = vmatprep.subr.mxu0 0.0
        %425 = vmatpush1.msra.mxu0 0.0
        %426 = vmatprep.subr.mxu0 0.0
        %427 = vmatpush1.msra.mxu0 0.0
        %428 = vmatprep.subr.mxu0 0.0
        %429 = vmatpush1.msra.mxu0 0.0
        %430 = vmatprep.subr.mxu0 0.0
        %431 = vmatpush1.msra.mxu0 0.0
        %432 = vmatprep.mubr.f32.mxu0 0.0
        %433 = vmatmul.mubr.f32.gmra.mrb[0].mxu0 %v351
        %v434 = vpop.f32.mrb[0].mxu0
        %v435 = vadd.f32 1e-05, %v434
        %v436 = vpop.f32.mrb[0].mxu0
        %437 = vdwg.mxu0
        %v438 = vrsqrt.pop %v435
        %v439 = vmul.f32 %v348, %v438
        %v440 = vlaneseq
        %v441 = vshrl.u32 %v440, 7
        %v442 = vsub.s32 1, %v441
        %v443 = vrot.slane %v276, %v442
        %v444 = vmul.f32 %v439, %v443
        %v445 = vlaneseq
        %v446 = vshrl.u32 %v445, 7
        %v447 = vsub.s32 2, %v446
        %v448 = vrot.slane %v276, %v447
        %v449 = vadd.f32 %v444, %v448
        %v450 = vmax.f32 %v449, 0.0
        %451 = vst [vmem:[%s258] sm:$0xff] %v450
        %s452 = scalar_lea.vmem %s258, 8 [#allocation8]
        %453 = vst [vmem:[%s452] sm:$0xff] %v450
        %s454 = sand.u32 %s135, 1
        %s455 = scalar_lea.sflag [#allocation4], %s454
        %s456 = sand.u32 %s135, 1
        %s457 = smul.addr %s456, 16
        %s458 = scalar_lea.vmem [#allocation8], %s457
        // Predicated region
        $region49: #{tpu_custom_call.1} parent=35 // pred_check
          %p459 = pneg %p145
        $region50: #{tpu_custom_call.1} parent=35 // pred_check_branch
          %461 = sbr.rel (%p459) target = $region52
        $region51: #{tpu_custom_call.1} parent=35 // pred_region
          %s463 = ssub.s32 256, 256
          %464 = vsyncadd %s455, %s463
          %s465 = smul.addr %s26, 2
          %s466 = sadd.s32 %s27, %s465
          %s467 = smul.addr %s466, 128
          %s468 = scalar_lea.hbm %s4, %s467
          %s469 = sshll.u32 %s458, 4
          %s470 = int_to_ptr.vmem [resolvable:$true] %s469
          %475 = dma.vmem_to_hbm [thread:$0]  %s470, 256, %s468, %s455, 128, 128, 8
        $region52: #{tpu_custom_call.1} parent=35 // pred_fallthru
          _
      $region36: #{tpu_custom_call.1} parent=5 // pred_fallthru
        _
      %p476 = scmp.le.s32.totalorder 2, %s17
      // Predicated region
      $region53: #{tpu_custom_call.1} parent=5 // pred_check
        %p477 = pneg %p476
      $region54: #{tpu_custom_call.1} parent=5 // pred_check_branch
        %479 = sbr.rel (%p477) target = $region56
      $region55: #{tpu_custom_call.1} parent=5 // pred_region
        %s480 = ssub.s32 %s17, 2
        // Predicated region
        $region57: #{tpu_custom_call.1} parent=55 // pred_check
          %p481 = pneg %p151
        $region58: #{tpu_custom_call.1} parent=55 // pred_check_branch
          %483 = sbr.rel (%p481) target = $region60
        $region59: #{tpu_custom_call.1} parent=55 // pred_region
          %s484 = sand.u32 %s136, 1
          %s485 = scalar_lea.sflag [#allocation4], %s484
          %s486 = sand.u32 %s136, 1
          %s487 = smul.addr %s486, 16
          %s488 = scalar_lea.vmem [#allocation8], %s487
          %489 = dma.done %s485, 256
        $region60: #{tpu_custom_call.1} parent=55 // pred_fallthru
          _
      $region56: #{tpu_custom_call.1} parent=5 // pred_fallthru
        _
    $region6: #{tpu_custom_call.1} parent=1 // loop_footer
      %s21 = sadd.s32 1, %s17
    $region7: #{tpu_custom_call.1} parent=1 // loop_footer_branch
      %16 = sbr.rel target = $region3
    $region8: #{tpu_custom_call.1} parent=1 // loop_exit
      _
    %490 = vsyncpa [#allocation3], 1
    %s491 = scalar_lea.sflag [#allocation3], 1
    %492 = vsyncpa %s491, 1
    %493 = vsyncpa [#allocation6], 1
    %494 = vsyncpa [#allocation4], 1
    %s495 = scalar_lea.sflag [#allocation4], 1
    %496 = vsyncpa %s495, 1

</llo_original>
